<compile_context>
chip_gen: v6e
topology: v6e:2x2x1
jax: 0.10.0
libtpu: 0.0.40
codegen_flags: <defaults>
</compile_context>

<pallas_src>
import functools
import math

import jax
import jax.numpy as jnp
from jax.experimental import pallas as pl
from jax.experimental.pallas import tpu as pltpu

LANE = 128
SUBLANE = 8


def _cdiv(a, b):
    return -(-a // b)


def _round_up(a, b):
    return _cdiv(a, b) * b


def _pad_lanes(w):
    return _round_up(w, LANE)


def _build_pe_table(d_model, max_len):
    """(max_len, d_model) float32 sin/cos table; same values as the PyTorch
    (max_len, 1, d_model) buffer (the singleton batch axis is added on use)."""
    assert d_model % 2 == 0, "even d_model assumed (matches the PyTorch buffer layout)"
    position = jnp.arange(max_len, dtype=jnp.float32)[:, None]                # (max_len, 1)
    div_term = jnp.exp(jnp.arange(0, d_model, 2, dtype=jnp.float32)
                       * (-math.log(10000.0) / d_model))                      # (d_model//2,)
    ang = position * div_term                                                 # (max_len, d_model//2)
    # Interleave: even cols = sin, odd cols = cos (matches pe[:,0::2] / pe[:,1::2]).
    return jnp.stack([jnp.sin(ang), jnp.cos(ang)], axis=-1).reshape(max_len, d_model)


def _vmem_caps():
    """(vmem_limit_bytes for Mosaic, double-buffered working-set budget)."""
    try:
        cap = int(pltpu.get_tpu_info().vmem_capacity_bytes)
    except Exception:
        cap = 0
    if cap <= 0:
        cap = 64 * 1024 * 1024                      # v7x-safe assumption
    limit = min(cap // 2, 64 * 1024 * 1024)          # 32 MiB on v7x, 64 MiB on v5e/v6e
    budget = (limit * 3) // 4                        # headroom for compiler scratch
    return limit, budget


def _pick_fold(seq_len, flat_width, w_cap=1024):
    """Fold factor r (r | seq_len, (r*flat_width) % 128 == 0) so the flattened
    row width is lane-dense (unmasked vst).  r == 1 if flat_width is already
    128-aligned or no valid fold exists (still correct, just masked stores)."""
    if flat_width % LANE == 0:
        return 1
    candidates = []
    for r in range(2, min(seq_len, 4096) + 1):
        if seq_len % r == 0 and (r * flat_width) % LANE == 0:
            candidates.append(r)
    if not candidates:
        return 1
    within = [r for r in candidates if r * flat_width <= w_cap]
    return max(within) if within else min(candidates)


def _pick_tile_rows(n_rows, row_bytes_total, x_row_bytes, budget,
                    max_tile_rows=None, target_x_block_bytes=4 * 1024 * 1024):
    """Rows per grid step for a (rows, W) slab: sized from the double-buffered
    VMEM budget and a ~4 MiB x-block target, kept a multiple of 8 whenever
    n_rows >= 8, with the grid count nudged even for v7x's two TensorCores."""
    ts = min(n_rows,
             max(1, budget // (2 * max(1, row_bytes_total))),
             max(1, target_x_block_bytes // max(1, x_row_bytes)))
    if max_tile_rows is not None:
        ts = max(1, min(ts, max_tile_rows))
    if n_rows < SUBLANE:
        return n_rows
    if ts >= n_rows and n_rows % SUBLANE == 0:
        return n_rows
    ts = max(SUBLANE, (min(ts, n_rows) // SUBLANE) * SUBLANE)
    g = _cdiv(n_rows, ts)
    if g >= 3 and g % 2 == 1:                        # best-effort 2-TC balance (v7x)
        ts2 = max(SUBLANE, _round_up(_cdiv(n_rows, g + 1), SUBLANE))
        if ts2 <= ts and _cdiv(n_rows, ts2) % 2 == 0:
            ts = ts2
    return ts


# ----------------------------- kernels ---------------------------------------

def _add_flat_kernel(x_ref, pe_ref, o_ref):
    # x / pe / out blocks: (TS, W) with identical, lane-dense layout.
    o_ref[...] = x_ref[...].astype(o_ref.dtype) + pe_ref[...]


def _add_replicate_kernel(x_ref, pe_ref, o_ref, *, batch, d_model):
    # x / out: (TS, batch*d_model); pe: (TS, d_model) float32 with d_model % 128 == 0.
    # Replicate pe across batch via 128-aligned slices (near-free vreg copies);
    # avoids both a pre-broadcast pe stream and sublane-padded 3-D blocks.
    pe = pe_ref[...].astype(jnp.float32)
    for b in range(batch):
        lo = b * d_model
        xb = x_ref[:, lo:lo + d_model].astype(jnp.float32)
        o_ref[:, lo:lo + d_model] = (xb + pe).astype(o_ref.dtype)


# ----------------------------- module ----------------------------------------

class PositionalEncoding:
    """JAX/Pallas port of the PyTorch PositionalEncoding module."""

    def __init__(self, d_model, max_len):
        self.d_model = int(d_model)
        self.max_len = int(max_len)
        self.pe = _build_pe_table(self.d_model, self.max_len)     # float32 buffer
        self._flat_pe_cache = {}          # (batch, fold, dtype) -> folded pe slab

    def _flat_pe(self, batch, fold, dtype):
        """Batch-broadcast, row-folded pe slab — built once and cached."""
        key = (int(batch), int(fold), jnp.dtype(dtype).name)
        slab = self._flat_pe_cache.get(key)
        if slab is None:
            rows = (self.max_len // fold) * fold
            slab = jnp.broadcast_to(self.pe[:rows, None, :],
                                    (rows, batch, self.d_model)).astype(dtype)
            slab = slab.reshape(rows // fold, fold * batch * self.d_model)
            self._flat_pe_cache[key] = slab
        return slab

    def __call__(self, x, *, force_pallas=False, max_tile_rows=None):
        S, B, D = x.shape
        assert D == self.d_model and S <= self.max_len
        out_dtype = jnp.result_type(x.dtype, jnp.float32)   # torch: x + float32 buffer

        x_item = jnp.dtype(x.dtype).itemsize
        o_item = jnp.dtype(out_dtype).itemsize

        # Tiny problems: a fused XLA add beats pallas_call fixed overhead.
        if not force_pallas and S * B * D * x_item < 256 * 1024:
            return (x + self.pe[:S, None, :]).astype(out_dtype)

        vmem_limit, budget = _vmem_caps()
        compiler_params = pltpu.CompilerParams(
            dimension_semantics=("parallel",),
            vmem_limit_bytes=vmem_limit,
        )

        if D % LANE == 0:
            # ---- wide path: raw pe table streamed, batch-replicated in-kernel ----
            W = B * D
            x2 = x.reshape(S, W)
            row_bytes = W * (x_item + o_item) + D * (4 + 4 + 4)   # x+out rows, pe row + f32 temps
            ts = _pick_tile_rows(S, row_bytes, W * x_item, budget, max_tile_rows)
            pe_in = self.pe
            if ts % SUBLANE != 0 and S != self.max_len:
                pe_in = self.pe[:S]          # tiny-S corner: full-extent pe block
            out2 = pl.pallas_call(
                functools.partial(_add_replicate_kernel, batch=B, d_model=D),
                out_shape=jax.ShapeDtypeStruct((S, W), out_dtype),
                grid_spec=pltpu.PrefetchScalarGridSpec(
                    num_scalar_prefetch=0,
                    grid=(_cdiv(S, ts),),
                    in_specs=[pl.BlockSpec((ts, W), lambda s: (s, 0)),
                              pl.BlockSpec((ts, D), lambda s: (s, 0))],
                    out_specs=pl.BlockSpec((ts, W), lambda s: (s, 0)),
                ),
                compiler_params=compiler_params,
            )(x2, pe_in)
            return out2.reshape(S, B, D)

        # ---- narrow path: fold rows into lanes, add the cached pe slab ----------
        fold = _pick_fold(S, B * D)
        W = fold * B * D
        n_rows = S // fold
        pe_flat = self._flat_pe(B, fold, out_dtype)               # (max_len//fold, W)
        x2 = x.reshape(n_rows, W)
        w_pad = _pad_lanes(W)
        row_bytes = w_pad * (x_item + 2 * o_item + 4)             # x + pe + out rows (+ temp)
        ts = _pick_tile_rows(n_rows, row_bytes, w_pad * x_item, budget, max_tile_rows)
        if ts % SUBLANE != 0 and n_rows != pe_flat.shape[0]:
            pe_flat = pe_flat[:n_rows]       # tiny-S corner: full-extent pe block
        out2 = pl.pallas_call(
            _add_flat_kernel,
            out_shape=jax.ShapeDtypeStruct((n_rows, W), out_dtype),
            grid_spec=pltpu.PrefetchScalarGridSpec(
                num_scalar_prefetch=0,
                grid=(_cdiv(n_rows, ts),),
                in_specs=[pl.BlockSpec((ts, W), lambda s: (s, 0)),
                          pl.BlockSpec((ts, W), lambda s: (s, 0))],
                out_specs=pl.BlockSpec((ts, W), lambda s: (s, 0)),
            ),
            compiler_params=compiler_params,
        )(x2, pe_flat)
        return out2.reshape(S, B, D)


if __name__ == "__main__":
    key = jax.random.PRNGKey(0)
    k1, k2, k3 = jax.random.split(key, 3)

    # 1) Small shape consistent with the module: seq=8, batch=2, d_model=32.
    #    Forces the Pallas narrow (folded-lane) path.
    mod = PositionalEncoding(d_model=32, max_len=16)
    x = jax.random.normal(k1, (8, 2, 32), dtype=jnp.float32)
    out = jax.block_until_ready(mod(x, force_pallas=True))
    ref = x + mod.pe[:8][:, None, :]
    assert out.shape == x.shape and out.dtype == jnp.float32
    assert jnp.allclose(out, ref, atol=1e-6), "mismatch vs reference (small / narrow)"

    # 2) Wide path (d_model % 128 == 0): in-kernel batch replication of pe.
    mod_w = PositionalEncoding(d_model=128, max_len=64)
    xw = jax.random.normal(k2, (16, 2, 128), dtype=jnp.float32)
    outw = jax.block_until_ready(mod_w(xw, force_pallas=True))
    refw = xw + mod_w.pe[:16][:, None, :]
    assert jnp.allclose(outw, refw, atol=1e-6), "mismatch vs reference (wide)"

    # 3) Medium narrow case through the auto path: multi-step grid with a ragged
    #    final block (max_tile_rows caps the tile so the grid has several steps).
    mod_m = PositionalEncoding(d_model=32, max_len=4096)
    xm = jax.random.normal(k3, (2500, 2, 32), dtype=jnp.float32)
    outm = jax.block_until_ready(mod_m(xm, max_tile_rows=64))
    refm = xm + mod_m.pe[:2500][:, None, :]
    assert jnp.allclose(outm, refm, atol=1e-6), "mismatch vs reference (medium / narrow)"

    print("KERNEL_OK")
</pallas_src>

<mosaic_0001>
module attributes {stable_mosaic.version = 11 : i64} {
  func.func @_add_flat_kernel(%arg0: i32, %arg1: memref<1x512xf32, #tpu.memory_space<vmem>>, %arg2: memref<1x512xf32, #tpu.memory_space<vmem>>, %arg3: memref<1x512xf32, #tpu.memory_space<vmem>>) attributes {dimension_semantics = [#tpu.dimension_semantics<parallel>], iteration_bounds = array<i64: 1>, scalar_prefetch = 0 : i64, scratch_operands = 0 : i64, tpu.core_type = #tpu.core_type<tc>, window_params = [{transform_indices = @transform_0, window_bounds = array<i64: 1, 512>}, {transform_indices = @transform_1, window_bounds = array<i64: 1, 512>}, {transform_indices = @transform_2, window_bounds = array<i64: 1, 512>}]} {
    %c0 = arith.constant 0 : index
    %c0_0 = arith.constant 0 : index
    %0 = vector.load %arg1[%c0, %c0_0] : memref<1x512xf32, #tpu.memory_space<vmem>>, vector<1x512xf32>
    %c0_1 = arith.constant 0 : index
    %c0_2 = arith.constant 0 : index
    %1 = vector.load %arg2[%c0_1, %c0_2] : memref<1x512xf32, #tpu.memory_space<vmem>>, vector<1x512xf32>
    %2 = arith.addf %0, %1 : vector<1x512xf32>
    %c0_3 = arith.constant 0 : index
    %c0_4 = arith.constant 0 : index
    %3 = vector.load %arg3[%c0_3, %c0_4] : memref<1x512xf32, #tpu.memory_space<vmem>>, vector<1x512xf32>
    tpu.vector_store %arg3[%c0_3, %c0_4], %2 {strides = array<i32>} : memref<1x512xf32, #tpu.memory_space<vmem>>, vector<1x512xf32>,
    return
  }
  func.func @transform_0(%arg0: i32) -> (i32, i32) {
    %c0_i32 = arith.constant 0 : i32
    %c0_i32_0 = arith.constant 0 : i32
    return %arg0, %c0_i32 : i32, i32
  }
  func.func @transform_1(%arg0: i32) -> (i32, i32) {
    %c0_i32 = arith.constant 0 : i32
    %c0_i32_0 = arith.constant 0 : i32
    return %arg0, %c0_i32 : i32, i32
  }
  func.func @transform_2(%arg0: i32) -> (i32, i32) {
    %c0_i32 = arith.constant 0 : i32
    %c0_i32_0 = arith.constant 0 : i32
    return %arg0, %c0_i32 : i32, i32
  }
}

</mosaic_0001>

<llo_original>
// kernel: tpu_custom_call.1
$region0: #{tpu_custom_call.1}
  #allocation0 [shape = 'u32[]', space=smem, size = 0x4, offset = 0x4, fixed_abs, tag = 'smem constant byte address 0x4 - core index']
  #allocation1 [shape = 'u32[144,128]{1,0:T(1,128)}', space=vmem, size = 0x12000, scoped, tag = 'internal scratch']
  %s0 = inlined_call_operand.hbm [shape: f32[1,512], index: 0, kind: input, shape index: {}]
  %s1 = inlined_call_operand.hbm [shape: f32[1,512], index: 1, kind: input, shape index: {}]
  %s2 = inlined_call_operand.hbm [shape: f32[1,512], index: 2, kind: output, shape index: {}]
  %s3 = sld [smem:[#allocation0]]
  $region26: #{tpu_custom_call.1} parent=0
    _
  %s5 = ssub.s32 1, %s3
  %s6 = scalar_select 0, %s5, %s3
  $region1: #{tpu_custom_call.1} parent=0
    #allocation2 [shape = 'u8[2048]{0}', space=vmem, size = 0x800, scoped, tag = 'input window, operand 0, single buffered']
    #allocation3 [shape = 's32[1]{0}', space=sflag, size = 0x4, scoped, tag = 'scoped memory for tpu_custom_call.1']
    #allocation4 [shape = 's32[1]{0}', space=sflag, size = 0x4, scoped, tag = 'scoped memory for tpu_custom_call.1']
    #allocation5 [shape = 'u8[2048]{0}', space=vmem, size = 0x800, scoped, tag = 'input window, operand 1, single buffered']
    #allocation6 [shape = 's32[1]{0}', space=sflag, size = 0x4, scoped, tag = 'scoped memory for tpu_custom_call.1']
    #allocation7 [shape = 'u8[2048]{0}', space=vmem, size = 0x800, scoped, tag = 'output window, operand 0, single buffered']
    %7 = vsyncpa [#allocation3], 0
    %8 = vsyncpa [#allocation6], 0
    %9 = vsyncpa [#allocation4], 0
    // Predicated region
    $region2: #{tpu_custom_call.1} parent=1 // pred_check
      _
    $region3: #{tpu_custom_call.1} parent=1 // pred_check_branch
      %11 = sbr.rel (0) target = $region5
    $region4: #{tpu_custom_call.1} parent=1 // pred_region
      %s13 = ssub.s32 64, 64
      %14 = vsyncadd [#allocation3], %s13
      %s16 = sshll.u32 [#allocation2], 4
      %s17 = int_to_ptr.vmem [resolvable:$true] %s16
      %19 = dma.hbm_to_vmem [thread:$0]  %s0, 64, %s17, [#allocation3]
    $region5: #{tpu_custom_call.1} parent=1 // pred_fallthru
      _
    // Predicated region
    $region6: #{tpu_custom_call.1} parent=1 // pred_check
      _
    $region7: #{tpu_custom_call.1} parent=1 // pred_check_branch
      %21 = sbr.rel (0) target = $region9
    $region8: #{tpu_custom_call.1} parent=1 // pred_region
      %s23 = ssub.s32 64, 64
      %24 = vsyncadd [#allocation6], %s23
      %s26 = sshll.u32 [#allocation5], 4
      %s27 = int_to_ptr.vmem [resolvable:$true] %s26
      %29 = dma.hbm_to_vmem [thread:$0]  %s1, 64, %s27, [#allocation6]
    $region9: #{tpu_custom_call.1} parent=1 // pred_fallthru
      _
    // Predicated region
    $region10: #{tpu_custom_call.1} parent=1 // pred_check
      _
    $region11: #{tpu_custom_call.1} parent=1 // pred_check_branch
      %31 = sbr.rel (0) target = $region13
    $region12: #{tpu_custom_call.1} parent=1 // pred_region
      %32 = dma.done [#allocation3], 64
    $region13: #{tpu_custom_call.1} parent=1 // pred_fallthru
      _
    // Predicated region
    $region14: #{tpu_custom_call.1} parent=1 // pred_check
      _
    $region15: #{tpu_custom_call.1} parent=1 // pred_check_branch
      %34 = sbr.rel (0) target = $region17
    $region16: #{tpu_custom_call.1} parent=1 // pred_region
      %35 = dma.done [#allocation6], 64
    $region17: #{tpu_custom_call.1} parent=1 // pred_fallthru
      _
    %v36 = vld [vmem:[#allocation2] sm:$0xf]
    %v37 = vld [vmem:[#allocation5] sm:$0xf]
    %v38 = vadd.f32 %v36, %v37
    %v39 = vlaneseq
    %vm40 = vcmp.ge.s32.totalorder %v39, 0
    %vm41 = vcmp.lt.s32.totalorder %v39, 512
    %vm42 = vmand %vm40, %vm41
    %43 = vst.msk [vmem:[#allocation7] sm:$0xf] %vm42, %v38
    // Predicated region
    $region18: #{tpu_custom_call.1} parent=1 // pred_check
      _
    $region19: #{tpu_custom_call.1} parent=1 // pred_check_branch
      %45 = sbr.rel (0) target = $region21
    $region20: #{tpu_custom_call.1} parent=1 // pred_region
      %s47 = ssub.s32 64, 64
      %48 = vsyncadd [#allocation4], %s47
      %s50 = sshll.u32 [#allocation7], 4
      %s51 = int_to_ptr.vmem [resolvable:$true] %s50
      %53 = dma.vmem_to_hbm [thread:$0]  %s51, 64, %s2, [#allocation4]
    $region21: #{tpu_custom_call.1} parent=1 // pred_fallthru
      _
    // Predicated region
    $region22: #{tpu_custom_call.1} parent=1 // pred_check
      _
    $region23: #{tpu_custom_call.1} parent=1 // pred_check_branch
      %55 = sbr.rel (0) target = $region25
    $region24: #{tpu_custom_call.1} parent=1 // pred_region
      %56 = dma.done [#allocation4], 64
    $region25: #{tpu_custom_call.1} parent=1 // pred_fallthru
      _
    %57 = vsyncpa [#allocation3], 1
    %58 = vsyncpa [#allocation6], 1
    %59 = vsyncpa [#allocation4], 1

</llo_original>
